<compile_context>
chip_gen: v7x
topology: tpu7x:2x2x1
jax: 0.10.0
libtpu: 0.0.40
codegen_flags: <defaults>
</compile_context>

<pallas_src>
import jax
import jax.numpy as jnp
import numpy as np
from jax.experimental import pallas as pl
from jax.experimental.pallas import tpu as pltpu


def _make_ctx_kernel():
    """Pass 1: accumulate the per-batch, per-head (masked) context matrix."""

    def kernel(x1_ref, x2_ref, mask_ref, ctx_ref, m_sc, s_sc, c_sc):
        t = pl.program_id(1)

        @pl.when(t == 0)
        def _init():
            m_sc[...] = jnp.full_like(m_sc, -jnp.inf)
            s_sc[...] = jnp.zeros_like(s_sc)
            c_sc[...] = jnp.zeros_like(c_sc)

        v = x1_ref[0]                                   # (tn, D) values, native dtype
        kf = x2_ref[0].astype(jnp.float32)              # (tn, D) keys, f32 for exp

        # Online (flash-style) column softmax statistics over N, all heads at once.
        tile_max = jnp.max(kf, axis=0, keepdims=True)   # (1, D)
        m_new = jnp.maximum(m_sc[...], tile_max)
        alpha = jnp.exp(m_sc[...] - m_new)              # (1, D) rescale of old stats
        e = jnp.exp(kf - m_new)                         # (tn, D)

        s_sc[...] = alpha * s_sc[...] + jnp.sum(e, axis=0, keepdims=True)

        # Context accumulation in (Dv, Dk) orientation: contract over the row
        # (N) axis of both operands -> single full-width MXU matmul per tile.
        contrib = jax.lax.dot_general(
            v, e.astype(v.dtype), (((0,), (0,)), ((), ())),
            preferred_element_type=jnp.float32)         # (Dv, Dk)
        c_sc[...] = c_sc[...] * alpha + contrib
        m_sc[...] = m_new

        @pl.when(t == pl.num_programs(1) - 1)
        def _finalize():
            # Exact f32 division: (1, Dk) broadcast over (Dv, Dk); negligible cost.
            ctx_vk = (c_sc[...] / s_sc[...]) * mask_ref[...]   # block-diag head mask
            ctx_ref[0] = jnp.transpose(ctx_vk)                 # (Dk, Dv), once per batch

    return kernel


def _make_attend_kernel(ln_eps=1e-5):
    """Pass 2: query softmax (segment-sum on MXU), attend, 1x1 conv, LayerNorm."""

    def kernel(x2_ref, ctx_ref, hb_ref, w_ref, b_ref, g_ref, beta_ref, o_ref):
        qf = x2_ref[0].astype(jnp.float32)              # (tn, D)

        # Per-head channel softmax.  Stabilize with the *global* row max (one
        # full-width lane reduce instead of per-head masked reduces); the
        # per-head denominators are an MXU segment-sum via the block-ones matrix.
        row_max = jnp.max(qf, axis=1, keepdims=True)    # (tn, 1)
        e = jnp.exp(qf - row_max)                       # (tn, D)
        den = jnp.dot(e, hb_ref[...], preferred_element_type=jnp.float32)  # (tn, D)
        den = jnp.maximum(den, 1e-30)                   # guard extreme dynamic range
        q_soft = e / den                                # exact f32 division

        # Attended values: one fused matmul against the block-diagonal context.
        att = jnp.dot(q_soft, ctx_ref[0], preferred_element_type=jnp.float32)  # (tn, Dv)

        # 1x1 conv reprojection: weight pre-transposed to (D, 2D) on the host.
        w = w_ref[...]
        proj = jnp.dot(att.astype(w.dtype), w,
                       preferred_element_type=jnp.float32) + b_ref[...]

        # LayerNorm over the 2D channel axis (f32 math).
        mean = jnp.mean(proj, axis=-1, keepdims=True)
        cen = proj - mean
        var = jnp.mean(cen * cen, axis=-1, keepdims=True)
        y = cen * jax.lax.rsqrt(var + ln_eps)
        o_ref[0] = (y * g_ref[...] + beta_ref[...]).astype(o_ref.dtype)

    return kernel


def _pick_block_n(n, target=512):
    """Largest divisor of n that is a multiple of 8 and <= target, else full n."""
    if n <= target:
        return n
    for cand in range(min(target, n), 7, -1):
        if cand % 8 == 0 and n % cand == 0:
            return cand
    return n


def cross_attention(x1, x2, conv_w, conv_b, ln_w, ln_b, *,
                    head_count, height, width, block_n=None):
    B, N, D = x1.shape
    assert N == height * width
    assert D % head_count == 0
    out_dim = 2 * D
    hkc = D // head_count

    if block_n is None:
        block_n = _pick_block_n(N)
    assert N % block_n == 0
    nt = N // block_n

    # Host-side constants (hoisted out of the kernels).
    cid = np.arange(D) // hkc
    head_block = jnp.asarray((cid[:, None] == cid[None, :]).astype(np.float32))  # (D, D)
    w_t = jnp.transpose(conv_w)                       # (D, 2D): no in-kernel transpose
    b2 = conv_b.reshape(1, out_dim).astype(jnp.float32)
    g2 = ln_w.reshape(1, out_dim).astype(jnp.float32)
    beta2 = ln_b.reshape(1, out_dim).astype(jnp.float32)

    # ---- Pass 1: per-batch masked context (Dk, Dv), f32 ----
    ctx = pl.pallas_call(
        _make_ctx_kernel(),
        out_shape=jax.ShapeDtypeStruct((B, D, D), jnp.float32),
        grid_spec=pltpu.PrefetchScalarGridSpec(
            num_scalar_prefetch=0,
            grid=(B, nt),
            in_specs=[
                pl.BlockSpec((1, block_n, D), lambda b, t: (b, t, 0)),  # x1 (values)
                pl.BlockSpec((1, block_n, D), lambda b, t: (b, t, 0)),  # x2 (keys)
                pl.BlockSpec((D, D), lambda b, t: (0, 0)),              # head mask
            ],
            out_specs=pl.BlockSpec((1, D, D), lambda b, t: (b, 0, 0)),
            scratch_shapes=[
                pltpu.VMEM((1, D), jnp.float32),     # running column max
                pltpu.VMEM((1, D), jnp.float32),     # running column exp-sum
                pltpu.VMEM((D, D), jnp.float32),     # context accumulator (Dv, Dk)
            ]),
        compiler_params=pltpu.CompilerParams(
            dimension_semantics=("parallel", "arbitrary")),
    )(x1, x2, head_block)

    # ---- Pass 2: attend + 1x1 conv + LayerNorm, fully parallel grid ----
    out = pl.pallas_call(
        _make_attend_kernel(ln_eps=1e-5),
        out_shape=jax.ShapeDtypeStruct((B, N, out_dim), x1.dtype),
        grid_spec=pltpu.PrefetchScalarGridSpec(
            num_scalar_prefetch=0,
            grid=(B, nt),
            in_specs=[
                pl.BlockSpec((1, block_n, D), lambda b, t: (b, t, 0)),  # x2 (queries)
                pl.BlockSpec((1, D, D), lambda b, t: (b, 0, 0)),        # context
                pl.BlockSpec((D, D), lambda b, t: (0, 0)),              # head block-ones
                pl.BlockSpec((D, out_dim), lambda b, t: (0, 0)),        # W^T
                pl.BlockSpec((1, out_dim), lambda b, t: (0, 0)),        # conv bias
                pl.BlockSpec((1, out_dim), lambda b, t: (0, 0)),        # LN gamma
                pl.BlockSpec((1, out_dim), lambda b, t: (0, 0)),        # LN beta
            ],
            out_specs=pl.BlockSpec((1, block_n, out_dim), lambda b, t: (b, t, 0)),
        ),
        compiler_params=pltpu.CompilerParams(
            dimension_semantics=("parallel", "parallel")),
    )(x2, ctx, head_block, w_t, b2, g2, beta2)

    return out


def cross_attention_ref(x1, x2, conv_w, conv_b, ln_w, ln_b, *, head_count, height, width):
    """Pure-JAX reference mirroring the PyTorch forward exactly."""
    B, N, D = x1.shape
    keys = jnp.swapaxes(x2, 1, 2)      # (B, D, N)
    queries = keys
    values = jnp.swapaxes(x1, 1, 2)    # (B, D, N)
    hkc = D // head_count
    hvc = D // head_count
    outs = []
    for i in range(head_count):
        k = jax.nn.softmax(keys[:, i * hkc:(i + 1) * hkc, :], axis=2)
        q = jax.nn.softmax(queries[:, i * hkc:(i + 1) * hkc, :], axis=1)
        v = values[:, i * hvc:(i + 1) * hvc, :]
        context = k @ jnp.swapaxes(v, 1, 2)                # (B, hkc, hvc)
        att = jnp.swapaxes(context, 1, 2) @ q              # (B, hvc, N)
        outs.append(att)
    agg = jnp.concatenate(outs, axis=1)                    # (B, D, N)
    proj = jnp.einsum("od,bdn->bon", conv_w, agg) + conv_b[None, :, None]
    proj = jnp.transpose(proj, (0, 2, 1))                  # (B, N, 2D)
    mean = jnp.mean(proj, axis=-1, keepdims=True)
    var = jnp.mean((proj - mean) ** 2, axis=-1, keepdims=True)
    y = (proj - mean) / jnp.sqrt(var + 1e-5)
    return y * ln_w + ln_b


if __name__ == "__main__":
    # Small but representative config: D = 64 channels, 4 heads, 16x16 spatial
    # grid -> N = 256, tiled into two 128-row blocks; out_dim = 128 keeps the
    # output stores lane-dense.
    B, D, H, W, heads = 2, 64, 16, 16, 4
    N = H * W

    key = jax.random.PRNGKey(0)
    k1, k2, kw, kb = jax.random.split(key, 4)
    x1 = jax.random.normal(k1, (B, N, D), dtype=jnp.float32)
    x2 = jax.random.normal(k2, (B, N, D), dtype=jnp.float32)

    # Conv2d(D, 2D, kernel_size=1) parameters (weight flattened to (2D, D));
    # PyTorch-style uniform init bound 1/sqrt(fan_in).
    bound = 1.0 / np.sqrt(D)
    conv_w = jax.random.uniform(kw, (2 * D, D), jnp.float32, -bound, bound)
    conv_b = jax.random.uniform(kb, (2 * D,), jnp.float32, -bound, bound)
    # LayerNorm(2D) defaults: weight=1, bias=0.
    ln_w = jnp.ones((2 * D,), jnp.float32)
    ln_b = jnp.zeros((2 * D,), jnp.float32)

    out = cross_attention(x1, x2, conv_w, conv_b, ln_w, ln_b,
                          head_count=heads, height=H, width=W, block_n=128)
    out = jax.block_until_ready(out)

    ref = cross_attention_ref(x1, x2, conv_w, conv_b, ln_w, ln_b,
                              head_count=heads, height=H, width=W)
    # With exact f32 softmax denominators the kernel matches the reference to
    # f32 accumulation-order noise; tolerance keeps headroom for MXU pass modes.
    np.testing.assert_allclose(np.asarray(out), np.asarray(ref), rtol=2e-3, atol=2e-3)

    print("KERNEL_OK")
</pallas_src>

<mosaic_0001>
module attributes {stable_mosaic.version = 11 : i64} {
  func.func @kernel(%arg0: i32, %arg1: i32, %arg2: memref<1x128x64xf32, #tpu.memory_space<vmem>>, %arg3: memref<1x128x64xf32, #tpu.memory_space<vmem>>, %arg4: memref<64x64xf32, #tpu.memory_space<vmem>>, %arg5: memref<1x64x64xf32, #tpu.memory_space<vmem>>, %arg6: memref<1x64xf32, #tpu.memory_space<vmem>>, %arg7: memref<1x64xf32, #tpu.memory_space<vmem>>, %arg8: memref<64x64xf32, #tpu.memory_space<vmem>>) attributes {dimension_semantics = [#tpu.dimension_semantics<parallel>, #tpu.dimension_semantics<arbitrary>], iteration_bounds = array<i64: 2, 2>, scalar_prefetch = 0 : i64, scratch_operands = 3 : i64, tpu.core_type = #tpu.core_type<tc>, window_params = [{transform_indices = @transform_0, window_bounds = array<i64: 1, 128, 64>}, {transform_indices = @transform_1, window_bounds = array<i64: 1, 128, 64>}, {pipeline_mode = #tpu.pipeline_mode<synchronous>, transform_indices = @transform_2, window_bounds = array<i64: 64, 64>}, {transform_indices = @transform_3, window_bounds = array<i64: 1, 64, 64>}]} {
    %c0_i32 = arith.constant 0 : i32
    %0 = arith.cmpi eq, %arg1, %c0_i32 : i32
    %1 = arith.extui %0 : i1 to i32
    %c0_i32_0 = arith.constant 0 : i32
    %2 = arith.cmpi ne, %1, %c0_i32_0 : i32
    scf.if %2 {
      %cst_23 = arith.constant 0xFF800000 : f32
      %33 = vector.broadcast %cst_23 : f32 to vector<1x64xf32>
      %c0_24 = arith.constant 0 : index
      %c0_25 = arith.constant 0 : index
      %34 = vector.load %arg6[%c0_24, %c0_25] : memref<1x64xf32, #tpu.memory_space<vmem>>, vector<1x64xf32>
      tpu.vector_store %arg6[%c0_24, %c0_25], %33 {strides = array<i32>} : memref<1x64xf32, #tpu.memory_space<vmem>>, vector<1x64xf32>,
      %cst_26 = arith.constant 0.000000e+00 : f32
      %35 = vector.broadcast %cst_26 : f32 to vector<1x64xf32>
      %c0_27 = arith.constant 0 : index
      %c0_28 = arith.constant 0 : index
      %36 = vector.load %arg7[%c0_27, %c0_28] : memref<1x64xf32, #tpu.memory_space<vmem>>, vector<1x64xf32>
      tpu.vector_store %arg7[%c0_27, %c0_28], %35 {strides = array<i32>} : memref<1x64xf32, #tpu.memory_space<vmem>>, vector<1x64xf32>,
      %cst_29 = arith.constant 0.000000e+00 : f32
      %37 = vector.broadcast %cst_29 : f32 to vector<64x64xf32>
      %c0_30 = arith.constant 0 : index
      %c0_31 = arith.constant 0 : index
      %38 = vector.load %arg8[%c0_30, %c0_31] : memref<64x64xf32, #tpu.memory_space<vmem>>, vector<64x64xf32>
      tpu.vector_store %arg8[%c0_30, %c0_31], %37 {strides = array<i32>} : memref<64x64xf32, #tpu.memory_space<vmem>>, vector<64x64xf32>,
    } else {
    }
    %c0 = arith.constant 0 : index
    %c0_1 = arith.constant 0 : index
    %c0_2 = arith.constant 0 : index
    %3 = vector.load %arg2[%c0, %c0_1, %c0_2] : memref<1x128x64xf32, #tpu.memory_space<vmem>>, vector<1x128x64xf32>
    %4 = vector.shape_cast %3 : vector<1x128x64xf32> to vector<128x64xf32>
    %c0_3 = arith.constant 0 : index
    %c0_4 = arith.constant 0 : index
    %c0_5 = arith.constant 0 : index
    %5 = vector.load %arg3[%c0_3, %c0_4, %c0_5] : memref<1x128x64xf32, #tpu.memory_space<vmem>>, vector<1x128x64xf32>
    %6 = vector.shape_cast %5 : vector<1x128x64xf32> to vector<128x64xf32>
    %cst = arith.constant dense<0xFF800000> : vector<64xf32>
    %7 = vector.multi_reduction <maximumf>, %6, %cst [0] : vector<128x64xf32> to vector<64xf32>
    %8 = vector.shape_cast %7 : vector<64xf32> to vector<1x64xf32>
    %c0_6 = arith.constant 0 : index
    %c0_7 = arith.constant 0 : index
    %9 = vector.load %arg6[%c0_6, %c0_7] : memref<1x64xf32, #tpu.memory_space<vmem>>, vector<1x64xf32>
    %10 = arith.maximumf %9, %8 : vector<1x64xf32>
    %c0_8 = arith.constant 0 : index
    %c0_9 = arith.constant 0 : index
    %11 = vector.load %arg6[%c0_8, %c0_9] : memref<1x64xf32, #tpu.memory_space<vmem>>, vector<1x64xf32>
    %12 = arith.subf %11, %10 : vector<1x64xf32>
    %13 = math.exp %12 : vector<1x64xf32>
    %14 = vector.broadcast %10 : vector<1x64xf32> to vector<128x64xf32>
    %15 = arith.subf %6, %14 : vector<128x64xf32>
    %16 = math.exp %15 : vector<128x64xf32>
    %c0_10 = arith.constant 0 : index
    %c0_11 = arith.constant 0 : index
    %17 = vector.load %arg7[%c0_10, %c0_11] : memref<1x64xf32, #tpu.memory_space<vmem>>, vector<1x64xf32>
    %18 = arith.mulf %13, %17 : vector<1x64xf32>
    %cst_12 = arith.constant dense<0.000000e+00> : vector<64xf32>
    %19 = vector.multi_reduction <add>, %16, %cst_12 [0] : vector<128x64xf32> to vector<64xf32>
    %20 = vector.shape_cast %19 : vector<64xf32> to vector<1x64xf32>
    %21 = arith.addf %18, %20 : vector<1x64xf32>
    %c0_13 = arith.constant 0 : index
    %c0_14 = arith.constant 0 : index
    %22 = vector.load %arg7[%c0_13, %c0_14] : memref<1x64xf32, #tpu.memory_space<vmem>>, vector<1x64xf32>
    tpu.vector_store %arg7[%c0_13, %c0_14], %21 {strides = array<i32>} : memref<1x64xf32, #tpu.memory_space<vmem>>, vector<1x64xf32>,
    %cst_15 = arith.constant dense<0.000000e+00> : vector<64x64xf32>
    %23 = tpu.matmul %4, %16, %cst_15 {dimension_numbers = #tpu.dot_dimension_numbers<[0], [0], [1], [1], [0, 1, 1, 1], [], []>} : vector<128x64xf32>, vector<128x64xf32>, vector<64x64xf32> -> vector<64x64xf32>
    %c0_16 = arith.constant 0 : index
    %c0_17 = arith.constant 0 : index
    %24 = vector.load %arg8[%c0_16, %c0_17] : memref<64x64xf32, #tpu.memory_space<vmem>>, vector<64x64xf32>
    %25 = vector.broadcast %13 : vector<1x64xf32> to vector<64x64xf32>
    %26 = arith.mulf %24, %25 : vector<64x64xf32>
    %27 = arith.addf %26, %23 : vector<64x64xf32>
    %c0_18 = arith.constant 0 : index
    %c0_19 = arith.constant 0 : index
    %28 = vector.load %arg8[%c0_18, %c0_19] : memref<64x64xf32, #tpu.memory_space<vmem>>, vector<64x64xf32>
    tpu.vector_store %arg8[%c0_18, %c0_19], %27 {strides = array<i32>} : memref<64x64xf32, #tpu.memory_space<vmem>>, vector<64x64xf32>,
    %c0_20 = arith.constant 0 : index
    %c0_21 = arith.constant 0 : index
    %29 = vector.load %arg6[%c0_20, %c0_21] : memref<1x64xf32, #tpu.memory_space<vmem>>, vector<1x64xf32>
    tpu.vector_store %arg6[%c0_20, %c0_21], %10 {strides = array<i32>} : memref<1x64xf32, #tpu.memory_space<vmem>>, vector<1x64xf32>,
    %c1_i32 = arith.constant 1 : i32
    %30 = arith.cmpi eq, %arg1, %c1_i32 : i32
    %31 = arith.extui %30 : i1 to i32
    %c0_i32_22 = arith.constant 0 : i32
    %32 = arith.cmpi ne, %31, %c0_i32_22 : i32
    scf.if %32 {
      %c0_23 = arith.constant 0 : index
      %c0_24 = arith.constant 0 : index
      %33 = vector.load %arg8[%c0_23, %c0_24] : memref<64x64xf32, #tpu.memory_space<vmem>>, vector<64x64xf32>
      %c0_25 = arith.constant 0 : index
      %c0_26 = arith.constant 0 : index
      %34 = vector.load %arg7[%c0_25, %c0_26] : memref<1x64xf32, #tpu.memory_space<vmem>>, vector<1x64xf32>
      %35 = vector.broadcast %34 : vector<1x64xf32> to vector<64x64xf32>
      %36 = arith.divf %33, %35 : vector<64x64xf32>
      %c0_27 = arith.constant 0 : index
      %c0_28 = arith.constant 0 : index
      %37 = vector.load %arg4[%c0_27, %c0_28] : memref<64x64xf32, #tpu.memory_space<vmem>>, vector<64x64xf32>
      %38 = arith.mulf %36, %37 : vector<64x64xf32>
      %39 = tpu.transpose %38, [1, 0] : vector<64x64xf32> -> vector<64x64xf32>
      %c0_29 = arith.constant 0 : index
      %c0_30 = arith.constant 0 : index
      %c0_31 = arith.constant 0 : index
      %40 = vector.load %arg5[%c0_29, %c0_30, %c0_31] : memref<1x64x64xf32, #tpu.memory_space<vmem>>, vector<1x64x64xf32>
      %41 = vector.shape_cast %40 : vector<1x64x64xf32> to vector<64x64xf32>
      %42 = vector.shape_cast %39 : vector<64x64xf32> to vector<1x64x64xf32>
      tpu.vector_store %arg5[%c0_29, %c0_30, %c0_31], %42 {strides = array<i32>} : memref<1x64x64xf32, #tpu.memory_space<vmem>>, vector<1x64x64xf32>,
    } else {
    }
    return
  }
  func.func @transform_0(%arg0: i32, %arg1: i32) -> (i32, i32, i32) {
    %c0_i32 = arith.constant 0 : i32
    %c0_i32_0 = arith.constant 0 : i32
    return %arg0, %arg1, %c0_i32 : i32, i32, i32
  }
  func.func @transform_1(%arg0: i32, %arg1: i32) -> (i32, i32, i32) {
    %c0_i32 = arith.constant 0 : i32
    %c0_i32_0 = arith.constant 0 : i32
    return %arg0, %arg1, %c0_i32 : i32, i32, i32
  }
  func.func @transform_2(%arg0: i32, %arg1: i32) -> (i32, i32) {
    %c0_i32 = arith.constant 0 : i32
    %c0_i32_0 = arith.constant 0 : i32
    %c0_i32_1 = arith.constant 0 : i32
    return %c0_i32, %c0_i32_0 : i32, i32
  }
  func.func @transform_3(%arg0: i32, %arg1: i32) -> (i32, i32, i32) {
    %c0_i32 = arith.constant 0 : i32
    %c0_i32_0 = arith.constant 0 : i32
    %c0_i32_1 = arith.constant 0 : i32
    return %arg0, %c0_i32, %c0_i32_0 : i32, i32, i32
  }
}

</mosaic_0001>

<llo_original>
// kernel: tpu_custom_call.1
$region0: #{tpu_custom_call.1}
  #allocation0 [shape = 'u32[]', space=smem, size = 0x4, offset = 0x4, fixed_abs, tag = 'smem constant byte address 0x4 - core index']
  #allocation1 [shape = 'u32[144,128]{1,0:T(1,128)}', space=vmem, size = 0x12000, scoped, tag = 'internal scratch']
  #allocation2 [shape = 'f32[1,64]{1,0:T(1,128)}', space=vmem, size = 0x200, scoped, tag = 'scratch operand']
  #allocation3 [shape = 'f32[1,64]{1,0:T(1,128)}', space=vmem, size = 0x200, scoped, tag = 'scratch operand']
  #allocation4 [shape = 'f32[64,64]{1,0:T(8,128)}', space=vmem, size = 0x8000, scoped, tag = 'scratch operand']
  %s0 = inlined_call_operand.vmem [shape: f32[2,256,64], index: 0, kind: input, shape index: {}]
  %s1 = inlined_call_operand.vmem [shape: f32[2,256,64], index: 1, kind: input, shape index: {}]
  %s2 = inlined_call_operand.vmem [shape: f32[64,64], index: 2, kind: input, shape index: {}]
  %s3 = inlined_call_operand.hbm [shape: f32[2,64,64], index: 3, kind: output, shape index: {}]
  %s4 = sld [smem:[#allocation0]]
  $region53: #{tpu_custom_call.1} parent=0
    _
  %s6 = ssub.s32 1, %s4
  %s7 = scalar_select 0, %s6, %s4
  $region1: #{tpu_custom_call.1} parent=0
    #allocation5 [shape = 'u8[65536]{0}', space=vmem, size = 0x10000, scoped, tag = 'output window, operand 0']
    #allocation6 [shape = 's32[2]{0}', space=sflag, size = 0x8, scoped, tag = 'scoped memory for tpu_custom_call.1']
    %8 = vsyncpa [#allocation6], 0
    %s9 = scalar_lea.sflag [#allocation6], 1
    %10 = vsyncpa %s9, 0
    loop: start=0, step=1, limit=6
    $region2: #{tpu_custom_call.1} parent=1 // loop_pre_header
      _
    $region3: #{tpu_custom_call.1} parent=1 // loop_header
      %s12 = sphi 0, %s16
      %p13 = scmp.ge.s32.totalorder %s12, 6
      %s19 = sphi 0, %s31
      %s20 = sphi 0, %s27
      %s21 = sphi 0, %s19
      %s22 = sphi 0, %s20
      %s23 = sphi 0, %s21
      %s24 = sphi 0, %s22
      %s36 = sphi 0, %s38
      %s39 = sphi 0, %s36
      %s40 = sphi 0, %s39
      %s56 = sphi 0, %s40
      %s64 = sphi 0, %s66
      %s67 = sphi 0, %s64
      %s68 = sphi 0, %s67
      %s84 = sphi 0, %s68
      %s88 = sphi 0, %s88
      %s90 = sphi 0, %s88
      %s91 = sphi 0, %s90
      %s105 = sphi 0, %s91
      %s111 = sphi 0, %s113
      %s114 = sphi 0, %s111
      %s115 = sphi 0, %s114
      %s131 = sphi 0, %s115
    $region4: #{tpu_custom_call.1} parent=1 // loop_header_branch
      %15 = sbr.rel (%p13) target = $region8
    $region5: #{tpu_custom_call.1} parent=1 // loop_body
      %s17 = ssub.s32 %s12, 1
      %s18 = ssub.s32 %s12, 2
      %s25 = sadd.s32 1, %s20
      %p26 = scmp.ge.s32.totalorder %s25, 2
      %s27 = scalar_select %p26, 0, %s25
      %s28 = sadd.s32 1, %s19
      %s29 = scalar_select %p26, %s28, %s19
      %p30 = scmp.ge.s32.totalorder %s29, 2
      %s31 = scalar_select %p30, 0, %s29
      %s32 = ssub.s32 %s19, %s31
      %s33 = ssub.s32 %s20, %s27
      %s34 = sor.u32 %s32, %s33
      %p35 = scmp.eq.s32.totalorder %s34, 0
      %s37 = sadd.s32 %s36, 1
      %s38 = scalar_select %p35, %s36, %s37
      %p41 = pneg %p35
      %p42 = scmp.eq.s32.totalorder %s12, 3
      %p43 = por %p41, %p42
      %p44 = scmp.ne.s32.totalorder %s36, %s39
      %p45 = scmp.eq.s32.totalorder %s12, 0
      %p46 = por %p44, %p45
      %p47 = scmp.ne.s32.totalorder %s36, %s39
      %p48 = scmp.eq.s32.totalorder %s17, 3
      %p49 = por %p47, %p48
      %p50 = scmp.ne.s32.totalorder %s39, %s40
      %p51 = scmp.eq.s32.totalorder %s17, 0
      %p52 = por %p50, %p51
      %p53 = scmp.ne.s32.totalorder %s39, %s40
      %p54 = scmp.eq.s32.totalorder %s18, 3
      %p55 = por %p53, %p54
      %p57 = scmp.ne.s32.totalorder %s40, %s56
      %p58 = scmp.eq.s32.totalorder %s18, 0
      %p59 = por %p57, %p58
      %s60 = ssub.s32 %s19, %s31
      %s61 = ssub.s32 %s20, %s27
      %s62 = sor.u32 %s60, %s61
      %p63 = scmp.eq.s32.totalorder %s62, 0
      %s65 = sadd.s32 %s64, 1
      %s66 = scalar_select %p63, %s64, %s65
      %p69 = pneg %p63
      %p70 = scmp.eq.s32.totalorder %s12, 3
      %p71 = por %p69, %p70
      %p72 = scmp.ne.s32.totalorder %s64, %s67
      %p73 = scmp.eq.s32.totalorder %s12, 0
      %p74 = por %p72, %p73
      %p75 = scmp.ne.s32.totalorder %s64, %s67
      %p76 = scmp.eq.s32.totalorder %s17, 3
      %p77 = por %p75, %p76
      %p78 = scmp.ne.s32.totalorder %s67, %s68
      %p79 = scmp.eq.s32.totalorder %s17, 0
      %p80 = por %p78, %p79
      %p81 = scmp.ne.s32.totalorder %s67, %s68
      %p82 = scmp.eq.s32.totalorder %s18, 3
      %p83 = por %p81, %p82
      %p85 = scmp.ne.s32.totalorder %s68, %s84
      %p86 = scmp.eq.s32.totalorder %s18, 0
      %p87 = por %p85, %p86
      %s89 = sadd.s32 %s88, 1
      %p92 = scmp.eq.s32.totalorder %s12, 3
      %p93 = scmp.ne.s32.totalorder %s88, %s90
      %p94 = scmp.eq.s32.totalorder %s12, 0
      %p95 = por %p93, %p94
      %p96 = scmp.ne.s32.totalorder %s88, %s90
      %p97 = scmp.eq.s32.totalorder %s17, 3
      %p98 = por %p96, %p97
      %p99 = scmp.ne.s32.totalorder %s90, %s91
      %p100 = scmp.eq.s32.totalorder %s17, 0
      %p101 = por %p99, %p100
      %p102 = scmp.ne.s32.totalorder %s90, %s91
      %p103 = scmp.eq.s32.totalorder %s18, 3
      %p104 = por %p102, %p103
      %p106 = scmp.ne.s32.totalorder %s91, %s105
      %p107 = scmp.eq.s32.totalorder %s18, 0
      %p108 = por %p106, %p107
      %s109 = ssub.s32 %s19, %s31
      %p110 = scmp.eq.s32.totalorder %s109, 0
      %s112 = sadd.s32 %s111, 1
      %s113 = scalar_select %p110, %s111, %s112
      %p116 = pneg %p110
      %p117 = scmp.eq.s32.totalorder %s12, 3
      %p118 = por %p116, %p117
      %p119 = scmp.ne.s32.totalorder %s111, %s114
      %p120 = scmp.eq.s32.totalorder %s12, 0
      %p121 = por %p119, %p120
      %p122 = scmp.ne.s32.totalorder %s111, %s114
      %p123 = scmp.eq.s32.totalorder %s17, 3
      %p124 = por %p122, %p123
      %p125 = scmp.ne.s32.totalorder %s114, %s115
      %p126 = scmp.eq.s32.totalorder %s17, 0
      %p127 = por %p125, %p126
      %p128 = scmp.ne.s32.totalorder %s114, %s115
      %p129 = scmp.eq.s32.totalorder %s18, 3
      %p130 = por %p128, %p129
      %p132 = scmp.ne.s32.totalorder %s115, %s131
      %p133 = scmp.eq.s32.totalorder %s18, 0
      %p134 = por %p132, %p133
      %p135 = scmp.le.s32.totalorder 1, %s12
      %p136 = scmp.lt.s32.totalorder %s12, 5
      %p137 = pnand %p135, %p136
      %p138 = pneg %p137
      // Predicated region
      $region9: #{tpu_custom_call.1} parent=5 // pred_check
        _
      $region10: #{tpu_custom_call.1} parent=5 // pred_check_branch
        %140 = sbr.rel (%p137) target = $region12
      $region11: #{tpu_custom_call.1} parent=5 // pred_region
        %s141 = ssub.s32 %s12, 1
        // Predicated region
        $region13: #{tpu_custom_call.1} parent=11 // pred_check
          %p142 = pneg %p101
        $region14: #{tpu_custom_call.1} parent=11 // pred_check_branch
          %144 = sbr.rel (%p142) target = $region16
        $region15: #{tpu_custom_call.1} parent=11 // pred_region
          _
        $region16: #{tpu_custom_call.1} parent=11 // pred_fallthru
          _
      $region12: #{tpu_custom_call.1} parent=5 // pred_fallthru
        _
      %p145 = scmp.lt.s32.totalorder %s12, 4
      // Predicated region
      $region17: #{tpu_custom_call.1} parent=5 // pred_check
        %p146 = pneg %p145
      $region18: #{tpu_custom_call.1} parent=5 // pred_check_branch
        %148 = sbr.rel (%p146) target = $region20
      $region19: #{tpu_custom_call.1} parent=5 // pred_region
        // Predicated region
        $region21: #{tpu_custom_call.1} parent=19 // pred_check
          %p149 = pneg %p46
        $region22: #{tpu_custom_call.1} parent=19 // pred_check_branch
          %151 = sbr.rel (%p149) target = $region24
        $region23: #{tpu_custom_call.1} parent=19 // pred_region
          %s152 = smul.u32 16, %s20
          %p153 = scmp.lt.s32.totalorder %s19, 1
          %s154 = scalar_select %p153, %s19, 1
          %p155 = scmp.lt.s32.totalorder %s152, 31
          %s156 = scalar_select %p155, %s152, 31
          %s157 = smul.addr %s154, 32
          %s158 = sadd.s32 %s156, %s157
          %s159 = smul.addr %s158, 8
          %s160 = scalar_lea.vmem %s0, %s159
          %s161 = smul.u32 16, %s20
        $region24: #{tpu_custom_call.1} parent=19 // pred_fallthru
          _
        // Predicated region
        $region25: #{tpu_custom_call.1} parent=19 // pred_check
          %p162 = pneg %p74
        $region26: #{tpu_custom_call.1} parent=19 // pred_check_branch
          %164 = sbr.rel (%p162) target = $region28
        $region27: #{tpu_custom_call.1} parent=19 // pred_region
          %s165 = smul.u32 16, %s20
          %p166 = scmp.lt.s32.totalorder %s19, 1
          %s167 = scalar_select %p166, %s19, 1
          %p168 = scmp.lt.s32.totalorder %s165, 31
          %s169 = scalar_select %p168, %s165, 31
          %s170 = smul.addr %s167, 32
          %s171 = sadd.s32 %s169, %s170
          %s172 = smul.addr %s171, 8
          %s173 = scalar_lea.vmem %s1, %s172
          %s174 = smul.u32 16, %s20
        $region28: #{tpu_custom_call.1} parent=19 // pred_fallthru
          _
      $region20: #{tpu_custom_call.1} parent=5 // pred_fallthru
        _
      %p175 = scmp.le.s32.totalorder 1, %s12
      %p176 = scmp.lt.s32.totalorder %s12, 5
      %p177 = pnand %p175, %p176
      %p178 = pneg %p177
      // Predicated region
      $region29: #{tpu_custom_call.1} parent=5 // pred_check
        _
      $region30: #{tpu_custom_call.1} parent=5 // pred_check_branch
        %180 = sbr.rel (%p177) target = $region32
      $region31: #{tpu_custom_call.1} parent=5 // pred_region
        %s181 = ssub.s32 %s12, 1
        %s182 = smul.u32 16, %s22
        %p183 = scmp.lt.s32.totalorder %s21, 1
        %s184 = scalar_select %p183, %s21, 1
        %p185 = scmp.lt.s32.totalorder %s182, 31
        %s186 = scalar_select %p185, %s182, 31
        %s187 = smul.addr %s184, 32
        %s188 = sadd.s32 %s186, %s187
        %s189 = smul.addr %s188, 8
        %s190 = scalar_lea.vmem %s0, %s189
        %p191 = pneg %p52
        %p192 = pneg %p49
        %s193 = smul.u32 16, %s22
        %p194 = scmp.lt.s32.totalorder %s21, 1
        %s195 = scalar_select %p194, %s21, 1
        %p196 = scmp.lt.s32.totalorder %s193, 31
        %s197 = scalar_select %p196, %s193, 31
        %s198 = smul.addr %s195, 32
        %s199 = sadd.s32 %s197, %s198
        %s200 = smul.addr %s199, 8
        %s201 = scalar_lea.vmem %s1, %s200
        %p202 = pneg %p80
        %p203 = pneg %p77
        %p204 = pneg %p101
        %p205 = pneg %p98
        %p206 = pneg %p127
        %p207 = pneg %p124
        %s208 = sand.u32 %s114, 1
        %s209 = scalar_lea.sflag [#allocation6], %s208
        %s210 = sand.u32 %s114, 1
        %s211 = smul.addr %s210, 64
        %s212 = scalar_lea.vmem [#allocation5], %s211
        %s213 = smul.u32 16, %s22
        %p214 = scmp.lt.s32.totalorder %s21, 1
        %s215 = scalar_select %p214, %s21, 1
        %p216 = scmp.lt.s32.totalorder %s213, 31
        %s217 = scalar_select %p216, %s213, 31
        %s218 = smul.addr %s215, 32
        %s219 = sadd.s32 %s217, %s218
        %s220 = smul.addr %s219, 8
        %s221 = scalar_lea.vmem %s0, %s220
        %s222 = smul.u32 16, %s22
        %s223 = smul.u32 16, %s22
        %p224 = scmp.lt.s32.totalorder %s21, 1
        %s225 = scalar_select %p224, %s21, 1
        %p226 = scmp.lt.s32.totalorder %s223, 31
        %s227 = scalar_select %p226, %s223, 31
        %s228 = smul.addr %s225, 32
        %s229 = sadd.s32 %s227, %s228
        %s230 = smul.addr %s229, 8
        %s231 = scalar_lea.vmem %s1, %s230
        %s232 = smul.u32 16, %s22
        %p233 = scmp.eq.s32.totalorder %s22, 0
        // Predicated region
        $region33: #{tpu_custom_call.1} parent=31 // pred_check
          %p234 = pneg %p233
        $region34: #{tpu_custom_call.1} parent=31 // pred_check_branch
          %236 = sbr.rel (%p234) target = $region36
        $region35: #{tpu_custom_call.1} parent=31 // pred_region
          %vm237 = vcmask 516096
          %238 = vst.msk [vmem:[#allocation2] sm:$0x1] %vm237, -inf
          %239 = vst.msk [vmem:[#allocation3] sm:$0x1] %vm237, 0.0
          %vm240 = vcmask 523264
          %241 = vst.msk [vmem:[#allocation4] sm:$0xff] %vm240, 0.0
          %242 = vst.msk [vmem:[#allocation4 + $0x8] sm:$0xff] %vm240, 0.0
          %243 = vst.msk [vmem:[#allocation4 + $0x10] sm:$0xff] %vm240, 0.0
          %244 = vst.msk [vmem:[#allocation4 + $0x18] sm:$0xff] %vm240, 0.0
          %245 = vst.msk [vmem:[#allocation4 + $0x20] sm:$0xff] %vm240, 0.0
          %246 = vst.msk [vmem:[#allocation4 + $0x28] sm:$0xff] %vm240, 0.0
          %247 = vst.msk [vmem:[#allocation4 + $0x30] sm:$0xff] %vm240, 0.0
          %248 = vst.msk [vmem:[#allocation4 + $0x38] sm:$0xff] %vm240, 0.0
        $region36: #{tpu_custom_call.1} parent=31 // pred_fallthru
          _
        %v249 = vld [vmem:[%s221] sm:$0xff]
        %v250 = vld [vmem:[%s221 + $0x8] sm:$0xff]
        %v251 = vld [vmem:[%s221 + $0x10] sm:$0xff]
        %v252 = vld [vmem:[%s221 + $0x18] sm:$0xff]
        %v253 = vld [vmem:[%s221 + $0x20] sm:$0xff]
        %v254 = vld [vmem:[%s221 + $0x28] sm:$0xff]
        %v255 = vld [vmem:[%s221 + $0x30] sm:$0xff]
        %v256 = vld [vmem:[%s221 + $0x38] sm:$0xff]
        %v257 = vld [vmem:[%s221 + $0x40] sm:$0xff]
        %v258 = vld [vmem:[%s221 + $0x48] sm:$0xff]
        %v259 = vld [vmem:[%s221 + $0x50] sm:$0xff]
        %v260 = vld [vmem:[%s221 + $0x58] sm:$0xff]
        %v261 = vld [vmem:[%s221 + $0x60] sm:$0xff]
        %v262 = vld [vmem:[%s221 + $0x68] sm:$0xff]
        %v263 = vld [vmem:[%s221 + $0x70] sm:$0xff]
        %v264 = vld [vmem:[%s221 + $0x78] sm:$0xff]
        %v265 = vld [vmem:[%s231] sm:$0xff]
        %v266 = vld [vmem:[%s231 + $0x8] sm:$0xff]
        %v267 = vld [vmem:[%s231 + $0x10] sm:$0xff]
        %v268 = vld [vmem:[%s231 + $0x18] sm:$0xff]
        %v269 = vld [vmem:[%s231 + $0x20] sm:$0xff]
        %v270 = vld [vmem:[%s231 + $0x28] sm:$0xff]
        %v271 = vld [vmem:[%s231 + $0x30] sm:$0xff]
        %v272 = vld [vmem:[%s231 + $0x38] sm:$0xff]
        %v273 = vld [vmem:[%s231 + $0x40] sm:$0xff]
        %v274 = vld [vmem:[%s231 + $0x48] sm:$0xff]
        %v275 = vld [vmem:[%s231 + $0x50] sm:$0xff]
        %v276 = vld [vmem:[%s231 + $0x58] sm:$0xff]
        %v277 = vld [vmem:[%s231 + $0x60] sm:$0xff]
        %v278 = vld [vmem:[%s231 + $0x68] sm:$0xff]
        %v279 = vld [vmem:[%s231 + $0x70] sm:$0xff]
        %v280 = vld [vmem:[%s231 + $0x78] sm:$0xff]
        %vm281 = vcmask 523264
        %v282 = vsel %vm281, %v265, -inf
        %v283 = vsel %vm281, %v266, -inf
        %v284 = vsel %vm281, %v267, -inf
        %v285 = vsel %vm281, %v268, -inf
        %v286 = vsel %vm281, %v269, -inf
        %v287 = vmax.f32 %v282, %v286
        %v288 = vsel %vm281, %v270, -inf
        %v289 = vmax.f32 %v283, %v288
        %v290 = vsel %vm281, %v271, -inf
        %v291 = vmax.f32 %v284, %v290
        %v292 = vsel %vm281, %v272, -inf
        %v293 = vmax.f32 %v285, %v292
        %v294 = vsel %vm281, %v273, -inf
        %v295 = vmax.f32 %v287, %v294
        %v296 = vsel %vm281, %v274, -inf
        %v297 = vmax.f32 %v289, %v296
        %v298 = vsel %vm281, %v275, -inf
        %v299 = vmax.f32 %v291, %v298
        %v300 = vsel %vm281, %v276, -inf
        %v301 = vmax.f32 %v293, %v300
        %v302 = vsel %vm281, %v277, -inf
        %v303 = vmax.f32 %v295, %v302
        %v304 = vsel %vm281, %v278, -inf
        %v305 = vmax.f32 %v297, %v304
        %v306 = vsel %vm281, %v279, -inf
        %v307 = vmax.f32 %v299, %v306
        %v308 = vsel %vm281, %v280, -inf
        %v309 = vmax.f32 %v301, %v308
        %v310 = vmax.f32 %v303, %v305
        %v311 = vmax.f32 %v307, %v309
        %v312 = vmax.f32 %v310, %v311
        %v313 = vrot.slane %v312, 4
        %v314 = vmax.f32 %v312, %v313
        %v315 = vrot.slane %v314, 2
        %v316 = vmax.f32 %v314, %v315
        %v317 = vrot.slane %v316, 1
        %v318 = vmax.f32 %v316, %v317
        %v319 = vld [vmem:[#allocation2] sm:$0x1]
        %v320 = vmax.f32 %v319, %v318
        %v321 = vsub.f32 %v319, %v320
        %v322 = vmul.f32 %v321, 1.442695
        %v323 = vpow.pop %v322
        %v325 = vlaneseq
        %v326 = vshrl.u32 %v325, 7
        %v327 = vsub.s32 0, %v326
        %v328 = vrot.slane %v320, %v327
        %v330 = vsub.f32 %v265, %v328
        %v331 = vsub.f32 %v266, %v328
        %v332 = vsub.f32 %v267, %v328
        %v333 = vsub.f32 %v268, %v328
        %v334 = vsub.f32 %v269, %v328
        %v335 = vsub.f32 %v270, %v328
        %v336 = vsub.f32 %v271, %v328
        %v337 = vsub.f32 %v272, %v328
        %v338 = vsub.f32 %v273, %v328
        %v339 = vsub.f32 %v274, %v328
        %v340 = vsub.f32 %v275, %v328
        %v341 = vsub.f32 %v276, %v328
        %v342 = vsub.f32 %v277, %v328
        %v343 = vsub.f32 %v278, %v328
        %v344 = vsub.f32 %v279, %v328
        %v345 = vsub.f32 %v280, %v328
        %v346 = vmul.f32 %v330, 1.442695
        %v347 = vpow.pop %v346
        %v348 = vmul.f32 %v331, 1.442695
        %v349 = vpow.pop %v348
        %v350 = vmul.f32 %v332, 1.442695
        %v351 = vpow.pop %v350
        %v352 = vmul.f32 %v333, 1.442695
        %v353 = vpow.pop %v352
        %v354 = vmul.f32 %v334, 1.442695
        %v355 = vpow.pop %v354
        %v356 = vmul.f32 %v335, 1.442695
        %v357 = vpow.pop %v356
        %v358 = vmul.f32 %v336, 1.442695
        %v359 = vpow.pop %v358
        %v360 = vmul.f32 %v337, 1.442695
        %v361 = vpow.pop %v360
        %v362 = vmul.f32 %v338, 1.442695
        %v363 = vpow.pop %v362
        %v364 = vmul.f32 %v339, 1.442695
        %v365 = vpow.pop %v364
        %v366 = vmul.f32 %v340, 1.442695
        %v367 = vpow.pop %v366
        %v368 = vmul.f32 %v341, 1.442695
        %v369 = vpow.pop %v368
        %v370 = vmul.f32 %v342, 1.442695
        %v371 = vpow.pop %v370
        %v372 = vmul.f32 %v343, 1.442695
        %v373 = vpow.pop %v372
        %v374 = vmul.f32 %v344, 1.442695
        %v375 = vpow.pop %v374
        %v376 = vmul.f32 %v345, 1.442695
        %v377 = vpow.pop %v376
        %v378 = vld [vmem:[#allocation3] sm:$0x1]
        %v379 = vmul.f32 %v323, %v378
        %v380 = vsel %vm281, %v347, 0.0
        %v381 = vsel %vm281, %v349, 0.0
        %v382 = vadd.f32 %v380, %v381
        %v383 = vsel %vm281, %v351, 0.0
        %v384 = vadd.f32 %v382, %v383
        %v385 = vsel %vm281, %v353, 0.0
        %v386 = vadd.f32 %v384, %v385
        %v387 = vsel %vm281, %v355, 0.0
        %v388 = vadd.f32 %v386, %v387
        %v389 = vsel %vm281, %v357, 0.0
        %v390 = vadd.f32 %v388, %v389
        %v391 = vsel %vm281, %v359, 0.0
        %v392 = vadd.f32 %v390, %v391
        %v393 = vsel %vm281, %v361, 0.0
        %v394 = vadd.f32 %v392, %v393
        %v395 = vsel %vm281, %v363, 0.0
        %v396 = vadd.f32 %v394, %v395
        %v397 = vsel %vm281, %v365, 0.0
        %v398 = vadd.f32 %v396, %v397
        %v399 = vsel %vm281, %v367, 0.0
        %v400 = vadd.f32 %v398, %v399
        %v401 = vsel %vm281, %v369, 0.0
        %v402 = vadd.f32 %v400, %v401
        %v403 = vsel %vm281, %v371, 0.0
        %v404 = vadd.f32 %v402, %v403
        %v405 = vsel %vm281, %v373, 0.0
        %v406 = vadd.f32 %v404, %v405
        %v407 = vsel %vm281, %v375, 0.0
        %v408 = vadd.f32 %v406, %v407
        %v409 = vsel %vm281, %v377, 0.0
        %v410 = vadd.f32 %v408, %v409
        %v411 = vrot.slane %v410, 4
        %v412 = vadd.f32 %v410, %v411
        %v413 = vrot.slane %v412, 2
        %v414 = vadd.f32 %v412, %v413
        %v415 = vrot.slane %v414, 1
        %v416 = vadd.f32 %v414, %v415
        %v417 = vadd.f32 %v379, %v416
        %vm418 = vcmask 516096
        %419 = vst.msk [vmem:[#allocation3] sm:$0x1] %vm418, %v417
        %420 = vxpose.xlu0.b32.start [1/16] %v249, 128
        %421 = vxpose.xlu0.b32.cont [2/16] %v250, 128
        %422 = vxpose.xlu0.b32.cont [3/16] %v251, 128
        %423 = vxpose.xlu0.b32.cont [4/16] %v252, 128
        %424 = vxpose.xlu0.b32.cont [5/16] %v253, 128
        %425 = vxpose.xlu0.b32.cont [6/16] %v254, 128
        %426 = vxpose.xlu0.b32.cont [7/16] %v255, 128
        %427 = vxpose.xlu0.b32.cont [8/16] %v256, 128
        %428 = vxpose.xlu0.b32.cont [9/16] %v257, 128
        %429 = vxpose.xlu0.b32.cont [10/16] %v258, 128
        %430 = vxpose.xlu0.b32.cont [11/16] %v259, 128
        %431 = vxpose.xlu0.b32.cont [12/16] %v260, 128
        %432 = vxpose.xlu0.b32.cont [13/16] %v261, 128
        %433 = vxpose.xlu0.b32.cont [14/16] %v262, 128
        %434 = vxpose.xlu0.b32.cont [15/16] %v263, 128
        %435 = vxpose.xlu0.b32.end [16/16] %v264, 128
        %v436 = vpop.trf.xlu0
        %v437 = vpop.trf.xlu0
        %v438 = vpop.trf.xlu0
        %v439 = vpop.trf.xlu0
        %v440 = vpop.trf.xlu0
        %v441 = vpop.trf.xlu0
        %v442 = vpop.trf.xlu0
        %v443 = vpop.trf.xlu0
        %v444 = vpop.trf.xlu0
        %v445 = vpop.trf.xlu0
        %v446 = vpop.trf.xlu0
        %v447 = vpop.trf.xlu0
        %v448 = vpop.trf.xlu0
        %v449 = vpop.trf.xlu0
        %v450 = vpop.trf.xlu0
        %v451 = vpop.trf.xlu0
        %452 = vmatprep.subr.mxu0 0.0
        %453 = vmatpush1.msra.mxu0 %v347
        %454 = vmatprep.subr.mxu0 0.0
        %455 = vmatpush1.msra.mxu0 %v349
        %456 = vmatprep.subr.mxu0 0.0
        %457 = vmatpush1.msra.mxu0 %v351
        %458 = vmatprep.subr.mxu0 0.0
        %459 = vmatpush1.msra.mxu0 %v353
        %460 = vmatprep.subr.mxu0 0.0
        %461 = vmatpush1.msra.mxu0 %v355
        %462 = vmatprep.subr.mxu0 0.0
        %463 = vmatpush1.msra.mxu0 %v357
        %464 = vmatprep.subr.mxu0 0.0
        %465 = vmatpush1.msra.mxu0 %v359
        %466 = vmatprep.subr.mxu0 0.0
        %467 = vmatpush1.msra.mxu0 %v361
        %468 = vmatprep.subr.mxu0 0.0
        %469 = vmatpush1.msra.mxu0 %v363
        %470 = vmatprep.subr.mxu0 0.0
        %471 = vmatpush1.msra.mxu0 %v365
        %472 = vmatprep.subr.mxu0 0.0
        %473 = vmatpush1.msra.mxu0 %v367
        %474 = vmatprep.subr.mxu0 0.0
        %475 = vmatpush1.msra.mxu0 %v369
        %476 = vmatprep.subr.mxu0 0.0
        %477 = vmatpush1.msra.mxu0 %v371
        %478 = vmatprep.subr.mxu0 0.0
        %479 = vmatpush1.msra.mxu0 %v373
        %480 = vmatprep.subr.mxu0 0.0
        %481 = vmatpush1.msra.mxu0 %v375
        %482 = vmatprep.subr.mxu0 0.0
        %483 = vmatpush1.msra.mxu0 %v377
        %484 = vmatprep.subr.mxu0 0.0
        %485 = vmatpush1.msra.mxu0 0.0
        %486 = vmatprep.subr.mxu0 0.0
        %487 = vmatpush1.msra.mxu0 0.0
        %488 = vmatprep.subr.mxu0 0.0
        %489 = vmatpush1.msra.mxu0 0.0
        %490 = vmatprep.subr.mxu0 0.0
        %491 = vmatpush1.msra.mxu0 0.0
        %492 = vmatprep.subr.mxu0 0.0
        %493 = vmatpush1.msra.mxu0 0.0
        %494 = vmatprep.subr.mxu0 0.0
        %495 = vmatpush1.msra.mxu0 0.0
        %496 = vmatprep.subr.mxu0 0.0
        %497 = vmatpush1.msra.mxu0 0.0
        %498 = vmatprep.subr.mxu0 0.0
        %499 = vmatpush1.msra.mxu0 0.0
        %500 = vmatprep.subr.mxu0 0.0
        %501 = vmatpush1.msra.mxu0 0.0
        %502 = vmatprep.subr.mxu0 0.0
        %503 = vmatpush1.msra.mxu0 0.0
        %504 = vmatprep.subr.mxu0 0.0
        %505 = vmatpush1.msra.mxu0 0.0
        %506 = vmatprep.subr.mxu0 0.0
        %507 = vmatpush1.msra.mxu0 0.0
        %508 = vmatprep.subr.mxu0 0.0
        %509 = vmatpush1.msra.mxu0 0.0
        %510 = vmatprep.subr.mxu0 0.0
        %511 = vmatpush1.msra.mxu0 0.0
        %512 = vmatprep.subr.mxu0 0.0
        %513 = vmatpush1.msra.mxu0 0.0
        %514 = vmatprep.subr.mxu0 0.0
        %515 = vmatpush1.msra.mxu0 0.0
        %516 = vmatprep.mubr.f32.mxu0 0.0
        %517 = vmatmul.mubr.f32.gmra.mrb[0].mxu0 %v436
        %v518 = vpop.f32.mrb[0].mxu0
        %v519 = vadd.f32 0.0, %v518
        %v520 = vpop.f32.mrb[0].mxu0
        %521 = vmatprep.mubr.f32.mxu0 0.0
        %522 = vmatmul.mubr.f32.gmra.mrb[0].mxu0 %v437
        %v523 = vpop.f32.mrb[0].mxu0
        %v524 = vadd.f32 0.0, %v523
        %v525 = vpop.f32.mrb[0].mxu0
        %526 = vmatprep.mubr.f32.mxu0 0.0
        %527 = vmatmul.mubr.f32.gmra.mrb[0].mxu0 %v438
        %v528 = vpop.f32.mrb[0].mxu0
        %v529 = vadd.f32 0.0, %v528
        %v530 = vpop.f32.mrb[0].mxu0
        %531 = vmatprep.mubr.f32.mxu0 0.0
        %532 = vmatmul.mubr.f32.gmra.mrb[0].mxu0 %v439
        %v533 = vpop.f32.mrb[0].mxu0
        %v534 = vadd.f32 0.0, %v533
        %v535 = vpop.f32.mrb[0].mxu0
        %536 = vmatprep.mubr.f32.mxu0 0.0
        %537 = vmatmul.mubr.f32.gmra.mrb[0].mxu0 %v440
        %v538 = vpop.f32.mrb[0].mxu0
        %v539 = vadd.f32 0.0, %v538
        %v540 = vpop.f32.mrb[0].mxu0
        %541 = vmatprep.mubr.f32.mxu0 0.0
        %542 = vmatmul.mubr.f32.gmra.mrb[0].mxu0 %v441
        %v543 = vpop.f32.mrb[0].mxu0
        %v544 = vadd.f32 0.0, %v543
        %v545 = vpop.f32.mrb[0].mxu0
        %546 = vmatprep.mubr.f32.mxu0 0.0
        %547 = vmatmul.mubr.f32.gmra.mrb[0].mxu0 %v442
        %v548 = vpop.f32.mrb[0].mxu0
        %v549 = vadd.f32 0.0, %v548
        %v550 = vpop.f32.mrb[0].mxu0
        %551 = vmatprep.mubr.f32.mxu0 0.0
        %552 = vmatmul.mubr.f32.gmra.mrb[0].mxu0 %v443
        %v553 = vpop.f32.mrb[0].mxu0
        %v554 = vadd.f32 0.0, %v553
        %v555 = vpop.f32.mrb[0].mxu0
        %556 = vdwg.mxu0
        %v557 = vld [vmem:[#allocation4] sm:$0xff]
        %v558 = vld [vmem:[#allocation4 + $0x8] sm:$0xff]
        %v559 = vld [vmem:[#allocation4 + $0x10] sm:$0xff]
        %v560 = vld [vmem:[#allocation4 + $0x18] sm:$0xff]
        %v561 = vld [vmem:[#allocation4 + $0x20] sm:$0xff]
        %v562 = vld [vmem:[#allocation4 + $0x28] sm:$0xff]
        %v563 = vld [vmem:[#allocation4 + $0x30] sm:$0xff]
        %v564 = vld [vmem:[#allocation4 + $0x38] sm:$0xff]
        %v566 = vlaneseq
        %v567 = vshrl.u32 %v566, 7
        %v568 = vsub.s32 0, %v567
        %v569 = vrot.slane %v323, %v568
        %v571 = vmul.f32 %v557, %v569
        %v572 = vmul.f32 %v558, %v569
        %v573 = vmul.f32 %v559, %v569
        %v574 = vmul.f32 %v560, %v569
        %v575 = vmul.f32 %v561, %v569
        %v576 = vmul.f32 %v562, %v569
        %v577 = vmul.f32 %v563, %v569
        %v578 = vmul.f32 %v564, %v569
        %v579 = vadd.f32 %v571, %v519
        %v580 = vadd.f32 %v572, %v524
        %v581 = vadd.f32 %v573, %v529
        %v582 = vadd.f32 %v574, %v534
        %v583 = vadd.f32 %v575, %v539
        %v584 = vadd.f32 %v576, %v544
        %v585 = vadd.f32 %v577, %v549
        %v586 = vadd.f32 %v578, %v554
        %587 = vst.msk [vmem:[#allocation4] sm:$0xff] %vm281, %v579
        %588 = vst.msk [vmem:[#allocation4 + $0x8] sm:$0xff] %vm281, %v580
        %589 = vst.msk [vmem:[#allocation4 + $0x10] sm:$0xff] %vm281, %v581
        %590 = vst.msk [vmem:[#allocation4 + $0x18] sm:$0xff] %vm281, %v582
        %591 = vst.msk [vmem:[#allocation4 + $0x20] sm:$0xff] %vm281, %v583
        %592 = vst.msk [vmem:[#allocation4 + $0x28] sm:$0xff] %vm281, %v584
        %593 = vst.msk [vmem:[#allocation4 + $0x30] sm:$0xff] %vm281, %v585
        %594 = vst.msk [vmem:[#allocation4 + $0x38] sm:$0xff] %vm281, %v586
        %595 = vst.msk [vmem:[#allocation2] sm:$0x1] %vm418, %v320
        %p596 = scmp.eq.s32.totalorder %s22, 1
        // Predicated region
        $region37: #{tpu_custom_call.1} parent=31 // pred_check
          %p597 = pneg %p596
        $region38: #{tpu_custom_call.1} parent=31 // pred_check_branch
          %599 = sbr.rel (%p597) target = $region40
        $region39: #{tpu_custom_call.1} parent=31 // pred_region
          %v600 = vld [vmem:[#allocation4] sm:$0xff]
          %v601 = vld [vmem:[#allocation4 + $0x8] sm:$0xff]
          %v602 = vld [vmem:[#allocation4 + $0x10] sm:$0xff]
          %v603 = vld [vmem:[#allocation4 + $0x18] sm:$0xff]
          %v604 = vld [vmem:[#allocation4 + $0x20] sm:$0xff]
          %v605 = vld [vmem:[#allocation4 + $0x28] sm:$0xff]
          %v606 = vld [vmem:[#allocation4 + $0x30] sm:$0xff]
          %v607 = vld [vmem:[#allocation4 + $0x38] sm:$0xff]
          %v608 = vld [vmem:[#allocation3] sm:$0x1]
          %v610 = vlaneseq
          %v611 = vshrl.u32 %v610, 7
          %v612 = vsub.s32 0, %v611
          %v613 = vrot.slane %v608, %v612
          %v615 = vrcp.pop %v613
          %v616 = vmul.f32 %v600, %v615
          %v617 = vmul.f32 %v601, %v615
          %v618 = vmul.f32 %v602, %v615
          %v619 = vmul.f32 %v603, %v615
          %v620 = vmul.f32 %v604, %v615
          %v621 = vmul.f32 %v605, %v615
          %v622 = vmul.f32 %v606, %v615
          %v623 = vmul.f32 %v607, %v615
          %v624 = vld [vmem:[%s2] sm:$0xff]
          %v625 = vld [vmem:[%s2 + $0x8] sm:$0xff]
          %v626 = vld [vmem:[%s2 + $0x10] sm:$0xff]
          %v627 = vld [vmem:[%s2 + $0x18] sm:$0xff]
          %v628 = vld [vmem:[%s2 + $0x20] sm:$0xff]
          %v629 = vld [vmem:[%s2 + $0x28] sm:$0xff]
          %v630 = vld [vmem:[%s2 + $0x30] sm:$0xff]
          %v631 = vld [vmem:[%s2 + $0x38] sm:$0xff]
          %v632 = vmul.f32 %v616, %v624
          %v633 = vmul.f32 %v617, %v625
          %v634 = vmul.f32 %v618, %v626
          %v635 = vmul.f32 %v619, %v627
          %v636 = vmul.f32 %v620, %v628
          %v637 = vmul.f32 %v621, %v629
          %v638 = vmul.f32 %v622, %v630
          %v639 = vmul.f32 %v623, %v631
          %640 = vxpose.xlu0.b32.start [1/16] %v632, 128
          %641 = vxpose.xlu0.b32.cont [2/16] %v633, 128
          %642 = vxpose.xlu0.b32.cont [3/16] %v634, 128
          %643 = vxpose.xlu0.b32.cont [4/16] %v635, 128
          %644 = vxpose.xlu0.b32.cont [5/16] %v636, 128
          %645 = vxpose.xlu0.b32.cont [6/16] %v637, 128
          %646 = vxpose.xlu0.b32.cont [7/16] %v638, 128
          %647 = vxpose.xlu0.b32.cont [8/16] %v639, 128
          %648 = vxpose.xlu0.b32.cont [9/16] 0.0, 128
          %649 = vxpose.xlu0.b32.cont [10/16] 0.0, 128
          %650 = vxpose.xlu0.b32.cont [11/16] 0.0, 128
          %651 = vxpose.xlu0.b32.cont [12/16] 0.0, 128
          %652 = vxpose.xlu0.b32.cont [13/16] 0.0, 128
          %653 = vxpose.xlu0.b32.cont [14/16] 0.0, 128
          %654 = vxpose.xlu0.b32.cont [15/16] 0.0, 128
          %655 = vxpose.xlu0.b32.end [16/16] 0.0, 128
          %v656 = vpop.trf.xlu0
          %v657 = vpop.trf.xlu0
          %v658 = vpop.trf.xlu0
          %v659 = vpop.trf.xlu0
          %v660 = vpop.trf.xlu0
          %v661 = vpop.trf.xlu0
          %v662 = vpop.trf.xlu0
          %v663 = vpop.trf.xlu0
          %v664 = vpop.trf.xlu0
          %v665 = vpop.trf.xlu0
          %v666 = vpop.trf.xlu0
          %v667 = vpop.trf.xlu0
          %v668 = vpop.trf.xlu0
          %v669 = vpop.trf.xlu0
          %v670 = vpop.trf.xlu0
          %v671 = vpop.trf.xlu0
          %672 = vst.msk [vmem:[%s212] sm:$0xff] %vm281, %v656
          %673 = vst.msk [vmem:[%s212 + $0x8] sm:$0xff] %vm281, %v657
          %674 = vst.msk [vmem:[%s212 + $0x10] sm:$0xff] %vm281, %v658
          %675 = vst.msk [vmem:[%s212 + $0x18] sm:$0xff] %vm281, %v659
          %676 = vst.msk [vmem:[%s212 + $0x20] sm:$0xff] %vm281, %v660
          %677 = vst.msk [vmem:[%s212 + $0x28] sm:$0xff] %vm281, %v661
          %678 = vst.msk [vmem:[%s212 + $0x30] sm:$0xff] %vm281, %v662
          %679 = vst.msk [vmem:[%s212 + $0x38] sm:$0xff] %vm281, %v663
        $region40: #{tpu_custom_call.1} parent=31 // pred_fallthru
          _
        %s680 = sand.u32 %s114, 1
        %s681 = scalar_lea.sflag [#allocation6], %s680
        %s682 = sand.u32 %s114, 1
        %s683 = smul.addr %s682, 64
        %s684 = scalar_lea.vmem [#allocation5], %s683
        // Predicated region
        $region41: #{tpu_custom_call.1} parent=31 // pred_check
          %p685 = pneg %p124
        $region42: #{tpu_custom_call.1} parent=31 // pred_check_branch
          %687 = sbr.rel (%p685) target = $region44
        $region43: #{tpu_custom_call.1} parent=31 // pred_region
          %s689 = ssub.s32 1024, 1024
          %690 = vsyncadd %s681, %s689
          %s691 = smul.addr %s21, 8
          %s692 = smul.addr %s691, 128
          %s693 = scalar_lea.hbm %s3, %s692
          %s694 = sshll.u32 %s684, 4
          %s695 = int_to_ptr.vmem [resolvable:$true] %s694
          %700 = dma.vmem_to_hbm [thread:$0]  %s695, 1024, %s693, %s681, 128, 128, 8
        $region44: #{tpu_custom_call.1} parent=31 // pred_fallthru
          _
      $region32: #{tpu_custom_call.1} parent=5 // pred_fallthru
        _
      %p701 = scmp.le.s32.totalorder 2, %s12
      // Predicated region
      $region45: #{tpu_custom_call.1} parent=5 // pred_check
        %p702 = pneg %p701
      $region46: #{tpu_custom_call.1} parent=5 // pred_check_branch
        %704 = sbr.rel (%p702) target = $region48
      $region47: #{tpu_custom_call.1} parent=5 // pred_region
        %s705 = ssub.s32 %s12, 2
        // Predicated region
        $region49: #{tpu_custom_call.1} parent=47 // pred_check
          %p706 = pneg %p130
        $region50: #{tpu_custom_call.1} parent=47 // pred_check_branch
          %708 = sbr.rel (%p706) target = $region52
        $region51: #{tpu_custom_call.1} parent=47 // pred_region
          %s709 = sand.u32 %s115, 1
          %s710 = scalar_lea.sflag [#allocation6], %s709
          %s711 = sand.u32 %s115, 1
          %s712 = smul.addr %s711, 64
          %s713 = scalar_lea.vmem [#allocation5], %s712
          %714 = dma.done %s710, 1024
        $region52: #{tpu_custom_call.1} parent=47 // pred_fallthru
          _
      $region48: #{tpu_custom_call.1} parent=5 // pred_fallthru
        _
    $region6: #{tpu_custom_call.1} parent=1 // loop_footer
      %s16 = sadd.s32 1, %s12
    $region7: #{tpu_custom_call.1} parent=1 // loop_footer_branch
      %11 = sbr.rel target = $region3
    $region8: #{tpu_custom_call.1} parent=1 // loop_exit
      _
    %715 = vsyncpa [#allocation6], 1
    %s716 = scalar_lea.sflag [#allocation6], 1
    %717 = vsyncpa %s716, 1

</llo_original>
